<compile_context>
chip_gen: v7x
topology: tpu7x:2x2x1
jax: 0.10.0
libtpu: 0.0.40
codegen_flags: <defaults>
</compile_context>

<pallas_src>
import numpy as np
import jax
import jax.numpy as jnp
from jax.experimental import pallas as pl
from jax.experimental.pallas import tpu as pltpu  # noqa: F401  (not needed: no grid/scratch)


def _full_spec(shape):
    # whole-array block (no grid) -> index_map takes no grid args
    return pl.BlockSpec(shape, lambda: (0,) * len(shape))


# ----------------------------------------------------------------------------
# Fused Pallas kernel
# ----------------------------------------------------------------------------

def _make_gcn_kernel(N, E, H, R, L, P, residual):
    """Build the fully fused GCN forward kernel (shapes are closure constants)."""

    def kernel(emb_ref, mask_ref, a_ne_ref, xex_ref,
               wt_emb_ref, wt_ex_ref, bt_ref,
               a_blk_ref, w_cat_ref, b_lyr_ref,
               sel_ref, projt_ref, w_bl_ref, b_bl_ref, sm_ref,
               out_ref):
        f32 = jnp.float32

        # --- init_forward: s/o nodes get sum_src norm * emb_src ---------------
        emb = emb_ref[...]
        agg = jnp.dot(a_ne_ref[...], emb, preferred_element_type=f32)
        emb = jnp.where(mask_ref[...] > 0.0, agg, emb)

        # --- fused feature-concat + emb_transform linear ----------------------
        # h = [emb | spo | access | pre_access] @ Wt + bt
        h = (jnp.dot(emb, wt_emb_ref[...], preferred_element_type=f32)
             + jnp.dot(xex_ref[...], wt_ex_ref[...], preferred_element_type=f32)
             + bt_ref[...])

        # --- R-GCN layers (relations & layers unrolled at trace time) ---------
        # TODO(synk): RGCNLayer source was not provided with the module; this is
        # the canonical DGL R-GCN update  h' = relu( sum_r A_r @ (h W_r) + h W_self + b ).
        prev_h = h
        for l in range(L):
            hw = jnp.dot(h, w_cat_ref[l], preferred_element_type=f32)     # [N,(R+1)H]
            acc = hw[:, :H] + b_lyr_ref[l]                                # self + bias
            hw_rel = jnp.concatenate(
                [hw[:, (r + 1) * H:(r + 2) * H] for r in range(R)], axis=0)  # [R*N,H]
            acc = acc + jnp.dot(a_blk_ref[...], hw_rel,
                                preferred_element_type=f32)               # sum_r A_r @ (h W_r)
            h = jnp.maximum(acc, 0.0)
            if residual and l != L - 1:
                h = h + prev_h
                prev_h = h

        # --- predict: predicate gather, per-graph mean pool, bilinear score ---
        h_p = jnp.dot(sel_ref[...], h, preferred_element_type=f32)          # [P,H]
        h_pool = jnp.dot(projt_ref[...], h_p, preferred_element_type=f32)   # [P,H]
        t = jnp.dot(h_p, w_bl_ref[...], preferred_element_type=f32)         # [P,H]
        score = jnp.sum(t * h_pool, axis=1, keepdims=True) + b_bl_ref[...]  # [P,1]

        # --- per-graph log-softmax (global-max shift is segment-invariant) ----
        z = score - jnp.max(score, axis=0, keepdims=True)
        seg_sum = jnp.dot(sm_ref[...], jnp.exp(z), preferred_element_type=f32)  # [P,1]
        out_ref[...] = z - jnp.log(seg_sum)

    return kernel


# ----------------------------------------------------------------------------
# Host-side prep helpers (static graph structure / one-time parameter packing)
# ----------------------------------------------------------------------------

def get_proj_mat(g_sizes):
    n = sum(g_sizes)
    mat = np.zeros((n, n), np.float32)
    p = 0
    for s in g_sizes:
        mat[p:p + s, p:p + s] = 1.0 / s
        p += s
    return mat


def get_same_seg_mat(g_sizes):
    n = sum(g_sizes)
    mat = np.zeros((n, n), np.float32)
    p = 0
    for s in g_sizes:
        mat[p:p + s, p:p + s] = 1.0
        p += s
    return mat


def gcn_forward(params, graph, g_sizes, residual=True):
    spo_np = np.asarray(graph["spo"])
    N = spo_np.shape[0]
    E = params["emb"].shape[1]
    H = params["wt"].shape[1]
    R = int(graph["a_rel"].shape[0])
    L = len(params["layers"])

    # ---- static graph-structure prep (concrete numpy; cached in practice) ----
    mask_ne = ((spo_np[:, 0] + spo_np[:, 2]) > 0).astype(np.float32)[:, None]      # [N,1]
    x_extra = np.concatenate([spo_np.astype(np.float32),
                              np.asarray(graph["access"], np.float32),
                              np.asarray(graph["pre_access"], np.float32)],
                             axis=1)                                               # [N,5]
    a_rel_np = np.asarray(graph["a_rel"], np.float32)
    a_ne = a_rel_np[0]                                                             # 'ne' edges
    a_blk = np.concatenate([a_rel_np[r] for r in range(R)], axis=1)                # [N,R*N]

    pred_idx = np.nonzero(spo_np[:, 1] != 0)[0]
    P = int(pred_idx.shape[0])
    assert P == sum(g_sizes)
    sel = np.zeros((P, N), np.float32)
    sel[np.arange(P), pred_idx] = 1.0                                              # [P,N]
    proj_t = get_proj_mat(g_sizes).T.copy()                                        # [P,P]
    sm = get_same_seg_mat(g_sizes)                                                 # [P,P]

    # ---- one-time parameter packing ----
    wt = params["wt"]
    wt_emb, wt_ex = wt[:E], wt[E:]
    w_cat = jnp.stack(
        [jnp.concatenate([lp["w_self"]] + [lp["w_rel"][r] for r in range(R)], axis=1)
         for lp in params["layers"]], axis=0)                                      # [L,H,(R+1)H]
    b_lyr = jnp.stack([lp["b"] for lp in params["layers"]], axis=0)                # [L,1,H]

    # embedding lookup (gather) stays as JAX glue: single exact XLA gather
    emb = jnp.take(params["emb"], graph["global_id"], axis=0)                      # [N,E]

    kernel = _make_gcn_kernel(N, E, H, R, L, P, residual)
    inputs = (emb, jnp.asarray(mask_ne), jnp.asarray(a_ne), jnp.asarray(x_extra),
              wt_emb, wt_ex, params["bt"],
              jnp.asarray(a_blk), w_cat, b_lyr,
              jnp.asarray(sel), jnp.asarray(proj_t), params["w_bl"], params["b_bl"],
              jnp.asarray(sm))

    out = pl.pallas_call(
        kernel,
        out_shape=jax.ShapeDtypeStruct((P, 1), jnp.float32),
        in_specs=[_full_spec(tuple(x.shape)) for x in inputs],
        out_specs=_full_spec((P, 1)),
    )(*inputs)
    return out.reshape(-1)


# ----------------------------------------------------------------------------
# Pure-JAX reference (for correctness check)
# ----------------------------------------------------------------------------

def ref_forward(params, graph, g_sizes, residual=True):
    PR = jax.lax.Precision.HIGHEST
    emb = jnp.take(params["emb"], graph["global_id"], axis=0)
    mask = ((graph["spo"][:, 0] + graph["spo"][:, 2]) > 0)[:, None]
    emb = jnp.where(mask, jnp.dot(graph["a_ne"], emb, precision=PR), emb)
    h = jnp.concatenate([emb, graph["spo"].astype(jnp.float32),
                         graph["access"], graph["pre_access"]], axis=1)
    h = jnp.dot(h, params["wt"], precision=PR) + params["bt"]
    prev_h = h
    L = len(params["layers"])
    for i, lp in enumerate(params["layers"]):
        acc = jnp.dot(h, lp["w_self"], precision=PR) + lp["b"]
        for r in range(graph["a_rel"].shape[0]):
            acc = acc + jnp.dot(graph["a_rel"][r],
                                jnp.dot(h, lp["w_rel"][r], precision=PR), precision=PR)
        h = jnp.maximum(acc, 0.0)
        if residual and i != L - 1:
            h = h + prev_h
            prev_h = h
    pred_idx = np.nonzero(np.asarray(graph["spo"][:, 1]) != 0)[0]
    h_p = h[jnp.asarray(pred_idx)]
    proj_t = jnp.asarray(get_proj_mat(g_sizes).T)
    h_pool = jnp.dot(proj_t, h_p, precision=PR)
    t = jnp.dot(h_p, params["w_bl"], precision=PR)
    out = jnp.sum(t * h_pool, axis=1) + params["b_bl"][0, 0]
    pieces, s0 = [], 0
    for s in g_sizes:
        pieces.append(jax.nn.log_softmax(out[s0:s0 + s], axis=0))
        s0 += s
    return jnp.concatenate(pieces, axis=0).reshape(-1)


# ----------------------------------------------------------------------------
# Deterministic parameter / graph construction
# ----------------------------------------------------------------------------

def xavier(key, shape):
    fan_in, fan_out = shape[-2], shape[-1]
    lim = float(np.sqrt(6.0 / (fan_in + fan_out)))
    return jax.random.uniform(key, shape, jnp.float32, -lim, lim)


if __name__ == "__main__":
    # config (small, consistent with the module): vocab=64, emb=16, hidden=32,
    # 2 edge types, 2 RGCN layers, 3 graphs of 8 nodes each.
    V, E, H, R, L = 64, 16, 32, 2, 2
    NUM_GRAPHS, NODES_PER_GRAPH = 3, 8
    N = NUM_GRAPHS * NODES_PER_GRAPH
    G_SIZES = [3, 2, 3]                 # predicates per graph
    IN_FEATS = E + 3 + 1 + 1            # emb ++ spo ++ access ++ pre_access

    key = jax.random.PRNGKey(0)
    (k_id, k_acc, k_pre, k_adj, k_emb, k_wt, k_bt,
     k_bl, k_bbl, k_layers) = jax.random.split(key, 10)

    # --- graph node data ---
    global_id = jax.random.randint(k_id, (N,), 2, V, dtype=jnp.int32)

    spo = np.zeros((N, 3), np.int32)
    pred_pos = [[1, 3, 5], [9, 12], [17, 20, 22]]       # 3,2,3 predicates per graph
    for ps in pred_pos:
        spo[ps, 1] = 1
    spo[[0, 2, 6, 8, 10, 13, 16, 18, 21], 0] = 1        # subjects
    spo[[4, 7, 11, 14, 19, 23], 2] = 1                  # objects
    spo = jnp.asarray(spo)

    access = jax.random.bernoulli(k_acc, 0.5, (N, 1)).astype(jnp.float32)
    pre_access = jax.random.bernoulli(k_pre, 0.5, (N, 1)).astype(jnp.float32)

    # --- per-relation dense adjacency with edge norms, edges only within a graph ---
    block_mask = np.zeros((N, N), np.float32)
    for g in range(NUM_GRAPHS):
        s = g * NODES_PER_GRAPH
        block_mask[s:s + NODES_PER_GRAPH, s:s + NODES_PER_GRAPH] = 1.0
    rand = np.asarray(jax.random.uniform(k_adj, (R, N, N)))
    adj = (rand < 0.4).astype(np.float32) * block_mask[None]
    deg = np.maximum(adj.sum(axis=-1, keepdims=True), 1.0)
    a_rel = jnp.asarray(adj / deg)          # [R, N, N], row-normalized (norm = 1/deg)
    a_ne = a_rel[0]                          # 'ne' edge type used by init_forward

    graph = dict(global_id=global_id, spo=spo, access=access,
                 pre_access=pre_access, a_ne=a_ne, a_rel=a_rel)

    # --- parameters ---
    emb_tbl = xavier(k_emb, (V, E))
    emb_tbl = emb_tbl.at[0:2].set(0.0)       # rows 0 and 1 zeroed as in __init__
    params = dict(
        emb=emb_tbl,
        wt=xavier(k_wt, (IN_FEATS, H)),
        bt=jax.random.uniform(k_bt, (1, H), jnp.float32, -0.1, 0.1),
        w_bl=xavier(k_bl, (H, H)),
        b_bl=jax.random.uniform(k_bbl, (1, 1), jnp.float32, -0.1, 0.1),
        layers=[],
    )
    lkeys = jax.random.split(k_layers, L * 2)
    for i in range(L):
        params["layers"].append(dict(
            w_rel=xavier(lkeys[2 * i], (R, H, H)),
            w_self=xavier(lkeys[2 * i + 1], (H, H)),
            b=jnp.zeros((1, H), jnp.float32),
        ))

    # --- run ---
    out = gcn_forward(params, graph, G_SIZES, residual=True)
    out = jax.block_until_ready(out)

    ref = jax.block_until_ready(ref_forward(params, graph, G_SIZES, residual=True))

    assert out.shape == (sum(G_SIZES),)
    assert bool(jnp.all(jnp.isfinite(out)))
    np.testing.assert_allclose(np.asarray(out), np.asarray(ref), rtol=1e-3, atol=1e-3)

    print("KERNEL_OK")
</pallas_src>

<mosaic_0001>
module attributes {stable_mosaic.version = 11 : i64} {
  func.func @kernel(%arg0: memref<24x16xf32, #tpu.memory_space<vmem>>, %arg1: memref<24x1xf32, #tpu.memory_space<vmem>>, %arg2: memref<24x24xf32, #tpu.memory_space<vmem>>, %arg3: memref<24x5xf32, #tpu.memory_space<vmem>>, %arg4: memref<16x32xf32, #tpu.memory_space<vmem>>, %arg5: memref<5x32xf32, #tpu.memory_space<vmem>>, %arg6: memref<1x32xf32, #tpu.memory_space<vmem>>, %arg7: memref<24x48xf32, #tpu.memory_space<vmem>>, %arg8: memref<2x32x96xf32, #tpu.memory_space<vmem>>, %arg9: memref<2x1x32xf32, #tpu.memory_space<vmem>>, %arg10: memref<8x24xf32, #tpu.memory_space<vmem>>, %arg11: memref<8x8xf32, #tpu.memory_space<vmem>>, %arg12: memref<32x32xf32, #tpu.memory_space<vmem>>, %arg13: memref<1x1xf32, #tpu.memory_space<vmem>>, %arg14: memref<8x8xf32, #tpu.memory_space<vmem>>, %arg15: memref<8x1xf32, #tpu.memory_space<vmem>>) attributes {dimension_semantics = [], scalar_prefetch = 0 : i64, scratch_operands = 0 : i64, tpu.core_type = #tpu.core_type<tc>} {
    %c0 = arith.constant 0 : index
    %c0_0 = arith.constant 0 : index
    %0 = vector.load %arg0[%c0, %c0_0] : memref<24x16xf32, #tpu.memory_space<vmem>>, vector<24x16xf32>
    %c0_1 = arith.constant 0 : index
    %c0_2 = arith.constant 0 : index
    %1 = vector.load %arg2[%c0_1, %c0_2] : memref<24x24xf32, #tpu.memory_space<vmem>>, vector<24x24xf32>
    %cst = arith.constant dense<0.000000e+00> : vector<24x16xf32>
    %2 = tpu.matmul %1, %0, %cst {dimension_numbers = #tpu.dot_dimension_numbers<[1], [0], [0], [1], [0, 0, 1, 1], [], []>} : vector<24x24xf32>, vector<24x16xf32>, vector<24x16xf32> -> vector<24x16xf32>
    %c0_3 = arith.constant 0 : index
    %c0_4 = arith.constant 0 : index
    %3 = vector.load %arg1[%c0_3, %c0_4] : memref<24x1xf32, #tpu.memory_space<vmem>>, vector<24x1xf32>
    %cst_5 = arith.constant 0.000000e+00 : f32
    %4 = vector.broadcast %cst_5 : f32 to vector<24x1xf32>
    %5 = arith.cmpf ogt, %3, %4 : vector<24x1xf32>
    %6 = vector.shape_cast %5 : vector<24x1xi1> to vector<24x1xi1>
    %7 = vector.broadcast %6 : vector<24x1xi1> to vector<24x16xi1>
    %8 = arith.select %7, %2, %0 : vector<24x16xi1>, vector<24x16xf32>
    %c0_6 = arith.constant 0 : index
    %c0_7 = arith.constant 0 : index
    %9 = vector.load %arg4[%c0_6, %c0_7] : memref<16x32xf32, #tpu.memory_space<vmem>>, vector<16x32xf32>
    %cst_8 = arith.constant dense<0.000000e+00> : vector<24x32xf32>
    %10 = tpu.matmul %8, %9, %cst_8 {dimension_numbers = #tpu.dot_dimension_numbers<[1], [0], [0], [1], [0, 0, 1, 1], [], []>} : vector<24x16xf32>, vector<16x32xf32>, vector<24x32xf32> -> vector<24x32xf32>
    %c0_9 = arith.constant 0 : index
    %c0_10 = arith.constant 0 : index
    %11 = vector.load %arg3[%c0_9, %c0_10] : memref<24x5xf32, #tpu.memory_space<vmem>>, vector<24x5xf32>
    %c0_11 = arith.constant 0 : index
    %c0_12 = arith.constant 0 : index
    %12 = vector.load %arg5[%c0_11, %c0_12] : memref<5x32xf32, #tpu.memory_space<vmem>>, vector<5x32xf32>
    %cst_13 = arith.constant dense<0.000000e+00> : vector<24x32xf32>
    %13 = tpu.matmul %11, %12, %cst_13 {dimension_numbers = #tpu.dot_dimension_numbers<[1], [0], [0], [1], [0, 0, 1, 1], [], []>} : vector<24x5xf32>, vector<5x32xf32>, vector<24x32xf32> -> vector<24x32xf32>
    %14 = arith.addf %10, %13 : vector<24x32xf32>
    %c0_14 = arith.constant 0 : index
    %c0_15 = arith.constant 0 : index
    %15 = vector.load %arg6[%c0_14, %c0_15] : memref<1x32xf32, #tpu.memory_space<vmem>>, vector<1x32xf32>
    %16 = vector.broadcast %15 : vector<1x32xf32> to vector<24x32xf32>
    %17 = arith.addf %14, %16 : vector<24x32xf32>
    %c0_16 = arith.constant 0 : index
    %c0_17 = arith.constant 0 : index
    %c0_18 = arith.constant 0 : index
    %18 = vector.load %arg8[%c0_16, %c0_17, %c0_18] : memref<2x32x96xf32, #tpu.memory_space<vmem>>, vector<1x32x96xf32>
    %19 = vector.shape_cast %18 : vector<1x32x96xf32> to vector<32x96xf32>
    %cst_19 = arith.constant dense<0.000000e+00> : vector<24x96xf32>
    %20 = tpu.matmul %17, %19, %cst_19 {dimension_numbers = #tpu.dot_dimension_numbers<[1], [0], [0], [1], [0, 0, 1, 1], [], []>} : vector<24x32xf32>, vector<32x96xf32>, vector<24x96xf32> -> vector<24x96xf32>
    %21 = vector.extract_strided_slice %20 {offsets = [0, 0], sizes = [24, 32], strides = [1, 1]} : vector<24x96xf32> to vector<24x32xf32>
    %c0_20 = arith.constant 0 : index
    %c0_21 = arith.constant 0 : index
    %c0_22 = arith.constant 0 : index
    %22 = vector.load %arg9[%c0_20, %c0_21, %c0_22] : memref<2x1x32xf32, #tpu.memory_space<vmem>>, vector<1x1x32xf32>
    %23 = vector.shape_cast %22 : vector<1x1x32xf32> to vector<1x32xf32>
    %24 = vector.broadcast %23 : vector<1x32xf32> to vector<24x32xf32>
    %25 = arith.addf %21, %24 : vector<24x32xf32>
    %26 = vector.extract_strided_slice %20 {offsets = [0, 32], sizes = [24, 32], strides = [1, 1]} : vector<24x96xf32> to vector<24x32xf32>
    %27 = vector.extract_strided_slice %20 {offsets = [0, 64], sizes = [24, 32], strides = [1, 1]} : vector<24x96xf32> to vector<24x32xf32>
    %28 = tpu.concatenate %26, %27 in 0 : vector<24x32xf32>, vector<24x32xf32> -> vector<48x32xf32>
    %c0_23 = arith.constant 0 : index
    %c0_24 = arith.constant 0 : index
    %29 = vector.load %arg7[%c0_23, %c0_24] : memref<24x48xf32, #tpu.memory_space<vmem>>, vector<24x48xf32>
    %cst_25 = arith.constant dense<0.000000e+00> : vector<24x32xf32>
    %30 = tpu.matmul %29, %28, %cst_25 {dimension_numbers = #tpu.dot_dimension_numbers<[1], [0], [0], [1], [0, 0, 1, 1], [], []>} : vector<24x48xf32>, vector<48x32xf32>, vector<24x32xf32> -> vector<24x32xf32>
    %31 = arith.addf %25, %30 : vector<24x32xf32>
    %cst_26 = arith.constant 0.000000e+00 : f32
    %32 = vector.broadcast %cst_26 : f32 to vector<24x32xf32>
    %33 = arith.maximumf %31, %32 : vector<24x32xf32>
    %34 = arith.addf %33, %17 : vector<24x32xf32>
    %c1 = arith.constant 1 : index
    %c0_27 = arith.constant 0 : index
    %c0_28 = arith.constant 0 : index
    %35 = vector.load %arg8[%c1, %c0_27, %c0_28] : memref<2x32x96xf32, #tpu.memory_space<vmem>>, vector<1x32x96xf32>
    %36 = vector.shape_cast %35 : vector<1x32x96xf32> to vector<32x96xf32>
    %cst_29 = arith.constant dense<0.000000e+00> : vector<24x96xf32>
    %37 = tpu.matmul %34, %36, %cst_29 {dimension_numbers = #tpu.dot_dimension_numbers<[1], [0], [0], [1], [0, 0, 1, 1], [], []>} : vector<24x32xf32>, vector<32x96xf32>, vector<24x96xf32> -> vector<24x96xf32>
    %38 = vector.extract_strided_slice %37 {offsets = [0, 0], sizes = [24, 32], strides = [1, 1]} : vector<24x96xf32> to vector<24x32xf32>
    %c1_30 = arith.constant 1 : index
    %c0_31 = arith.constant 0 : index
    %c0_32 = arith.constant 0 : index
    %39 = vector.load %arg9[%c1_30, %c0_31, %c0_32] : memref<2x1x32xf32, #tpu.memory_space<vmem>>, vector<1x1x32xf32>
    %40 = vector.shape_cast %39 : vector<1x1x32xf32> to vector<1x32xf32>
    %41 = vector.broadcast %40 : vector<1x32xf32> to vector<24x32xf32>
    %42 = arith.addf %38, %41 : vector<24x32xf32>
    %43 = vector.extract_strided_slice %37 {offsets = [0, 32], sizes = [24, 32], strides = [1, 1]} : vector<24x96xf32> to vector<24x32xf32>
    %44 = vector.extract_strided_slice %37 {offsets = [0, 64], sizes = [24, 32], strides = [1, 1]} : vector<24x96xf32> to vector<24x32xf32>
    %45 = tpu.concatenate %43, %44 in 0 : vector<24x32xf32>, vector<24x32xf32> -> vector<48x32xf32>
    %c0_33 = arith.constant 0 : index
    %c0_34 = arith.constant 0 : index
    %46 = vector.load %arg7[%c0_33, %c0_34] : memref<24x48xf32, #tpu.memory_space<vmem>>, vector<24x48xf32>
    %cst_35 = arith.constant dense<0.000000e+00> : vector<24x32xf32>
    %47 = tpu.matmul %46, %45, %cst_35 {dimension_numbers = #tpu.dot_dimension_numbers<[1], [0], [0], [1], [0, 0, 1, 1], [], []>} : vector<24x48xf32>, vector<48x32xf32>, vector<24x32xf32> -> vector<24x32xf32>
    %48 = arith.addf %42, %47 : vector<24x32xf32>
    %cst_36 = arith.constant 0.000000e+00 : f32
    %49 = vector.broadcast %cst_36 : f32 to vector<24x32xf32>
    %50 = arith.maximumf %48, %49 : vector<24x32xf32>
    %c0_37 = arith.constant 0 : index
    %c0_38 = arith.constant 0 : index
    %51 = vector.load %arg10[%c0_37, %c0_38] : memref<8x24xf32, #tpu.memory_space<vmem>>, vector<8x24xf32>
    %cst_39 = arith.constant dense<0.000000e+00> : vector<8x32xf32>
    %52 = tpu.matmul %51, %50, %cst_39 {dimension_numbers = #tpu.dot_dimension_numbers<[1], [0], [0], [1], [0, 0, 1, 1], [], []>} : vector<8x24xf32>, vector<24x32xf32>, vector<8x32xf32> -> vector<8x32xf32>
    %c0_40 = arith.constant 0 : index
    %c0_41 = arith.constant 0 : index
    %53 = vector.load %arg11[%c0_40, %c0_41] : memref<8x8xf32, #tpu.memory_space<vmem>>, vector<8x8xf32>
    %cst_42 = arith.constant dense<0.000000e+00> : vector<8x32xf32>
    %54 = tpu.matmul %53, %52, %cst_42 {dimension_numbers = #tpu.dot_dimension_numbers<[1], [0], [0], [1], [0, 0, 1, 1], [], []>} : vector<8x8xf32>, vector<8x32xf32>, vector<8x32xf32> -> vector<8x32xf32>
    %c0_43 = arith.constant 0 : index
    %c0_44 = arith.constant 0 : index
    %55 = vector.load %arg12[%c0_43, %c0_44] : memref<32x32xf32, #tpu.memory_space<vmem>>, vector<32x32xf32>
    %cst_45 = arith.constant dense<0.000000e+00> : vector<8x32xf32>
    %56 = tpu.matmul %52, %55, %cst_45 {dimension_numbers = #tpu.dot_dimension_numbers<[1], [0], [0], [1], [0, 0, 1, 1], [], []>} : vector<8x32xf32>, vector<32x32xf32>, vector<8x32xf32> -> vector<8x32xf32>
    %57 = arith.mulf %56, %54 : vector<8x32xf32>
    %cst_46 = arith.constant dense<0.000000e+00> : vector<8xf32>
    %58 = vector.multi_reduction <add>, %57, %cst_46 [1] : vector<8x32xf32> to vector<8xf32>
    %59 = vector.shape_cast %58 : vector<8xf32> to vector<8x1xf32>
    %c0_47 = arith.constant 0 : index
    %c0_48 = arith.constant 0 : index
    %60 = vector.load %arg13[%c0_47, %c0_48] : memref<1x1xf32, #tpu.memory_space<vmem>>, vector<1x1xf32>
    %61 = vector.broadcast %60 : vector<1x1xf32> to vector<8x1xf32>
    %62 = arith.addf %59, %61 : vector<8x1xf32>
    %cst_49 = arith.constant dense<0xFF800000> : vector<1xf32>
    %63 = vector.multi_reduction <maximumf>, %62, %cst_49 [0] : vector<8x1xf32> to vector<1xf32>
    %64 = vector.shape_cast %63 : vector<1xf32> to vector<1x1xf32>
    %65 = vector.broadcast %64 : vector<1x1xf32> to vector<8x1xf32>
    %66 = arith.subf %62, %65 : vector<8x1xf32>
    %c0_50 = arith.constant 0 : index
    %c0_51 = arith.constant 0 : index
    %67 = vector.load %arg14[%c0_50, %c0_51] : memref<8x8xf32, #tpu.memory_space<vmem>>, vector<8x8xf32>
    %68 = math.exp %66 : vector<8x1xf32>
    %cst_52 = arith.constant dense<0.000000e+00> : vector<8x1xf32>
    %69 = tpu.matmul %67, %68, %cst_52 {dimension_numbers = #tpu.dot_dimension_numbers<[1], [0], [0], [1], [0, 0, 1, 1], [], []>} : vector<8x8xf32>, vector<8x1xf32>, vector<8x1xf32> -> vector<8x1xf32>
    %70 = math.log %69 : vector<8x1xf32>
    %71 = arith.subf %66, %70 : vector<8x1xf32>
    %c0_53 = arith.constant 0 : index
    %c0_54 = arith.constant 0 : index
    %72 = vector.load %arg15[%c0_53, %c0_54] : memref<8x1xf32, #tpu.memory_space<vmem>>, vector<8x1xf32>
    tpu.vector_store %arg15[%c0_53, %c0_54], %71 {strides = array<i32>} : memref<8x1xf32, #tpu.memory_space<vmem>>, vector<8x1xf32>,
    return
  }
}

</mosaic_0001>

<llo_original>
// kernel: tpu_custom_call.1
$region0: #{tpu_custom_call.1}
  #allocation0 [shape = 'u32[]', space=smem, size = 0x4, offset = 0x4, fixed_abs, tag = 'smem constant byte address 0x4 - core index']
  #allocation1 [shape = 'u32[144,128]{1,0:T(1,128)}', space=vmem, size = 0x12000, scoped, tag = 'internal scratch']
  #allocation2 [shape = 'f32[1,1]{1,0:T(1,128)S(1)}', space=vmem, size = 0x200, scoped, tag = 'scoped memory for tpu_custom_call.1']
  %s0 = inlined_call_operand.vmem [shape: f32[24,16], index: 0, kind: input, shape index: {}]
  %s1 = inlined_call_operand.vmem [shape: f32[24,1], index: 1, kind: input, shape index: {}]
  %s2 = inlined_call_operand.vmem [shape: f32[24,24], index: 2, kind: input, shape index: {}]
  %s3 = inlined_call_operand.vmem [shape: f32[24,5], index: 3, kind: input, shape index: {}]
  %s4 = inlined_call_operand.hbm [shape: f32[16,32], index: 4, kind: input, shape index: {}]
  %s5 = inlined_call_operand.hbm [shape: f32[5,32], index: 5, kind: input, shape index: {}]
  %s6 = inlined_call_operand.hbm [shape: f32[1,32], index: 6, kind: input, shape index: {}]
  %s7 = inlined_call_operand.hbm [shape: f32[24,48], index: 7, kind: input, shape index: {}]
  %s8 = inlined_call_operand.vmem [shape: f32[2,32,96], index: 8, kind: input, shape index: {}]
  %s9 = inlined_call_operand.vmem [shape: f32[2,1,32], index: 9, kind: input, shape index: {}]
  %s10 = inlined_call_operand.vmem [shape: f32[8,24], index: 10, kind: input, shape index: {}]
  %s11 = inlined_call_operand.vmem [shape: f32[8,8], index: 11, kind: input, shape index: {}]
  %s12 = inlined_call_operand.vmem [shape: f32[32,32], index: 12, kind: input, shape index: {}]
  %s13 = inlined_call_operand.<no memory space> [shape: f32[1,1], index: 13, kind: input, shape index: {}]
  %s14 = inlined_call_operand.vmem [shape: f32[8,8], index: 14, kind: input, shape index: {}]
  %s15 = inlined_call_operand.vmem [shape: f32[8,1], index: 15, kind: output, shape index: {}]
  %s16 = sld [smem:[#allocation0]]
  $region86: #{tpu_custom_call.1} parent=0
    _
  %s18 = ssub.s32 1, %s16
  %s19 = scalar_select 0, %s18, %s16
  %v20 = vstv %s13
  %21 = vst [vmem:[#allocation2] sm:$0x1] %v20
  $region1: #{tpu_custom_call.1} parent=0
    #allocation3 [shape = 'u8[8192]{0}', space=vmem, size = 0x2000, scoped, tag = 'input window, operand 4, single buffered']
    #allocation4 [shape = 's32[1]{0}', space=sflag, size = 0x4, scoped, tag = 'scoped memory for tpu_custom_call.1']
    #allocation5 [shape = 'u8[4096]{0}', space=vmem, size = 0x1000, scoped, tag = 'input window, operand 5, single buffered']
    #allocation6 [shape = 's32[1]{0}', space=sflag, size = 0x4, scoped, tag = 'scoped memory for tpu_custom_call.1']
    #allocation7 [shape = 'u8[512]{0}', space=vmem, size = 0x400, scoped, tag = 'input window, operand 6, single buffered']
    #allocation8 [shape = 'u8[12288]{0}', space=vmem, size = 0x3000, scoped, tag = 'input window, operand 7, single buffered']
    #allocation9 [shape = 's32[1]{0}', space=sflag, size = 0x4, scoped, tag = 'scoped memory for tpu_custom_call.1']
    %22 = vsyncpa [#allocation4], 0
    %23 = vsyncpa [#allocation6], 0
    %24 = vsyncpa [#allocation9], 0
    // Predicated region
    $region2: #{tpu_custom_call.1} parent=1 // pred_check
      _
    $region3: #{tpu_custom_call.1} parent=1 // pred_check_branch
      %26 = sbr.rel (0) target = $region5
    $region4: #{tpu_custom_call.1} parent=1 // pred_region
      _
    $region5: #{tpu_custom_call.1} parent=1 // pred_fallthru
      _
    // Predicated region
    $region6: #{tpu_custom_call.1} parent=1 // pred_check
      _
    $region7: #{tpu_custom_call.1} parent=1 // pred_check_branch
      %28 = sbr.rel (0) target = $region9
    $region8: #{tpu_custom_call.1} parent=1 // pred_region
      _
    $region9: #{tpu_custom_call.1} parent=1 // pred_fallthru
      _
    // Predicated region
    $region10: #{tpu_custom_call.1} parent=1 // pred_check
      _
    $region11: #{tpu_custom_call.1} parent=1 // pred_check_branch
      %30 = sbr.rel (0) target = $region13
    $region12: #{tpu_custom_call.1} parent=1 // pred_region
      _
    $region13: #{tpu_custom_call.1} parent=1 // pred_fallthru
      _
    // Predicated region
    $region14: #{tpu_custom_call.1} parent=1 // pred_check
      _
    $region15: #{tpu_custom_call.1} parent=1 // pred_check_branch
      %32 = sbr.rel (0) target = $region17
    $region16: #{tpu_custom_call.1} parent=1 // pred_region
      _
    $region17: #{tpu_custom_call.1} parent=1 // pred_fallthru
      _
    // Predicated region
    $region18: #{tpu_custom_call.1} parent=1 // pred_check
      _
    $region19: #{tpu_custom_call.1} parent=1 // pred_check_branch
      %34 = sbr.rel (0) target = $region21
    $region20: #{tpu_custom_call.1} parent=1 // pred_region
      %s36 = ssub.s32 256, 256
      %37 = vsyncadd [#allocation4], %s36
      %s38 = sshll.u32 [#allocation3], 4
      %s39 = int_to_ptr.vmem [resolvable:$true] %s38
      %44 = dma.hbm_to_vmem [thread:$0]  %s4, 256, %s39, [#allocation4], 128, 128, 8
    $region21: #{tpu_custom_call.1} parent=1 // pred_fallthru
      _
    // Predicated region
    $region22: #{tpu_custom_call.1} parent=1 // pred_check
      _
    $region23: #{tpu_custom_call.1} parent=1 // pred_check_branch
      %46 = sbr.rel (0) target = $region25
    $region24: #{tpu_custom_call.1} parent=1 // pred_region
      %s48 = ssub.s32 128, 128
      %49 = vsyncadd [#allocation6], %s48
      %s51 = sshll.u32 [#allocation5], 4
      %s52 = int_to_ptr.vmem [resolvable:$true] %s51
      %54 = dma.hbm_to_vmem [thread:$0]  %s5, 128, %s52, [#allocation6]
    $region25: #{tpu_custom_call.1} parent=1 // pred_fallthru
      _
    // Predicated region
    $region26: #{tpu_custom_call.1} parent=1 // pred_check
      _
    $region27: #{tpu_custom_call.1} parent=1 // pred_check_branch
      %56 = sbr.rel (0) target = $region29
    $region28: #{tpu_custom_call.1} parent=1 // pred_region
      %s58 = ssub.s32 16, 16
      %59 = vsyncadd [#allocation6], %s58
      %s61 = sshll.u32 [#allocation7], 4
      %s62 = int_to_ptr.vmem [resolvable:$true] %s61
      %64 = dma.hbm_to_vmem [thread:$0]  %s6, 16, %s62, [#allocation6]
    $region29: #{tpu_custom_call.1} parent=1 // pred_fallthru
      _
    // Predicated region
    $region30: #{tpu_custom_call.1} parent=1 // pred_check
      _
    $region31: #{tpu_custom_call.1} parent=1 // pred_check_branch
      %66 = sbr.rel (0) target = $region33
    $region32: #{tpu_custom_call.1} parent=1 // pred_region
      %s68 = ssub.s32 384, 384
      %69 = vsyncadd [#allocation9], %s68
      %s70 = sshll.u32 [#allocation8], 4
      %s71 = int_to_ptr.vmem [resolvable:$true] %s70
      %76 = dma.hbm_to_vmem [thread:$0]  %s7, 384, %s71, [#allocation9], 128, 128, 8
    $region33: #{tpu_custom_call.1} parent=1 // pred_fallthru
      _
    // Predicated region
    $region34: #{tpu_custom_call.1} parent=1 // pred_check
      _
    $region35: #{tpu_custom_call.1} parent=1 // pred_check_branch
      %78 = sbr.rel (0) target = $region37
    $region36: #{tpu_custom_call.1} parent=1 // pred_region
      _
    $region37: #{tpu_custom_call.1} parent=1 // pred_fallthru
      _
    // Predicated region
    $region38: #{tpu_custom_call.1} parent=1 // pred_check
      _
    $region39: #{tpu_custom_call.1} parent=1 // pred_check_branch
      %80 = sbr.rel (0) target = $region41
    $region40: #{tpu_custom_call.1} parent=1 // pred_region
      _
    $region41: #{tpu_custom_call.1} parent=1 // pred_fallthru
      _
    // Predicated region
    $region42: #{tpu_custom_call.1} parent=1 // pred_check
      _
    $region43: #{tpu_custom_call.1} parent=1 // pred_check_branch
      %82 = sbr.rel (0) target = $region45
    $region44: #{tpu_custom_call.1} parent=1 // pred_region
      _
    $region45: #{tpu_custom_call.1} parent=1 // pred_fallthru
      _
    // Predicated region
    $region46: #{tpu_custom_call.1} parent=1 // pred_check
      _
    $region47: #{tpu_custom_call.1} parent=1 // pred_check_branch
      %84 = sbr.rel (0) target = $region49
    $region48: #{tpu_custom_call.1} parent=1 // pred_region
      _
    $region49: #{tpu_custom_call.1} parent=1 // pred_fallthru
      _
    // Predicated region
    $region50: #{tpu_custom_call.1} parent=1 // pred_check
      _
    $region51: #{tpu_custom_call.1} parent=1 // pred_check_branch
      %86 = sbr.rel (0) target = $region53
    $region52: #{tpu_custom_call.1} parent=1 // pred_region
      _
    $region53: #{tpu_custom_call.1} parent=1 // pred_fallthru
      _
    // Predicated region
    $region54: #{tpu_custom_call.1} parent=1 // pred_check
      _
    $region55: #{tpu_custom_call.1} parent=1 // pred_check_branch
      %88 = sbr.rel (0) target = $region57
    $region56: #{tpu_custom_call.1} parent=1 // pred_region
      _
    $region57: #{tpu_custom_call.1} parent=1 // pred_fallthru
      _
    // Predicated region
    $region58: #{tpu_custom_call.1} parent=1 // pred_check
      _
    $region59: #{tpu_custom_call.1} parent=1 // pred_check_branch
      %90 = sbr.rel (0) target = $region61
    $region60: #{tpu_custom_call.1} parent=1 // pred_region
      _
    $region61: #{tpu_custom_call.1} parent=1 // pred_fallthru
      _
    // Predicated region
    $region62: #{tpu_custom_call.1} parent=1 // pred_check
      _
    $region63: #{tpu_custom_call.1} parent=1 // pred_check_branch
      %92 = sbr.rel (0) target = $region65
    $region64: #{tpu_custom_call.1} parent=1 // pred_region
      %93 = dma.done [#allocation4], 256
    $region65: #{tpu_custom_call.1} parent=1 // pred_fallthru
      _
    // Predicated region
    $region66: #{tpu_custom_call.1} parent=1 // pred_check
      _
    $region67: #{tpu_custom_call.1} parent=1 // pred_check_branch
      %95 = sbr.rel (0) target = $region69
    $region68: #{tpu_custom_call.1} parent=1 // pred_region
      %96 = dma.done [#allocation6], 128
    $region69: #{tpu_custom_call.1} parent=1 // pred_fallthru
      _
    // Predicated region
    $region70: #{tpu_custom_call.1} parent=1 // pred_check
      _
    $region71: #{tpu_custom_call.1} parent=1 // pred_check_branch
      %98 = sbr.rel (0) target = $region73
    $region72: #{tpu_custom_call.1} parent=1 // pred_region
      %99 = dma.done [#allocation6], 16
    $region73: #{tpu_custom_call.1} parent=1 // pred_fallthru
      _
    // Predicated region
    $region74: #{tpu_custom_call.1} parent=1 // pred_check
      _
    $region75: #{tpu_custom_call.1} parent=1 // pred_check_branch
      %101 = sbr.rel (0) target = $region77
    $region76: #{tpu_custom_call.1} parent=1 // pred_region
      %102 = dma.done [#allocation9], 384
    $region77: #{tpu_custom_call.1} parent=1 // pred_fallthru
      _
    %v103 = vld [vmem:[%s0] sm:$0xff]
    %v104 = vld [vmem:[%s0 + $0x8] sm:$0xff]
    %v105 = vld [vmem:[%s0 + $0x10] sm:$0xff]
    %v106 = vld [vmem:[%s2] sm:$0xff]
    %v107 = vld [vmem:[%s2 + $0x8] sm:$0xff]
    %v108 = vld [vmem:[%s2 + $0x10] sm:$0xff]
    %vm109 = vcmask 195584
    %v111 = vsel %vm109, %v106, 0
    %v114 = vsel %vm109, %v107, 0
    %v117 = vsel %vm109, %v108, 0
    %119 = vmatprep.subr.mxu0 0.0
    %120 = vmatpush1.msra.mxu0 %v103
    %121 = vmatprep.subr.mxu0 0.0
    %122 = vmatpush1.msra.mxu0 %v104
    %123 = vmatprep.subr.mxu0 0.0
    %124 = vmatpush1.msra.mxu0 %v105
    %125 = vmatprep.subr.mxu0 0.0
    %126 = vmatpush1.msra.mxu0 0.0
    %127 = vmatprep.subr.mxu0 0.0
    %128 = vmatpush1.msra.mxu0 0.0
    %129 = vmatprep.subr.mxu0 0.0
    %130 = vmatpush1.msra.mxu0 0.0
    %131 = vmatprep.subr.mxu0 0.0
    %132 = vmatpush1.msra.mxu0 0.0
    %133 = vmatprep.subr.mxu0 0.0
    %134 = vmatpush1.msra.mxu0 0.0
    %135 = vmatprep.subr.mxu0 0.0
    %136 = vmatpush1.msra.mxu0 0.0
    %137 = vmatprep.subr.mxu0 0.0
    %138 = vmatpush1.msra.mxu0 0.0
    %139 = vmatprep.subr.mxu0 0.0
    %140 = vmatpush1.msra.mxu0 0.0
    %141 = vmatprep.subr.mxu0 0.0
    %142 = vmatpush1.msra.mxu0 0.0
    %143 = vmatprep.subr.mxu0 0.0
    %144 = vmatpush1.msra.mxu0 0.0
    %145 = vmatprep.subr.mxu0 0.0
    %146 = vmatpush1.msra.mxu0 0.0
    %147 = vmatprep.subr.mxu0 0.0
    %148 = vmatpush1.msra.mxu0 0.0
    %149 = vmatprep.subr.mxu0 0.0
    %150 = vmatpush1.msra.mxu0 0.0
    %151 = vmatprep.subr.mxu0 0.0
    %152 = vmatpush1.msra.mxu0 0.0
    %153 = vmatprep.subr.mxu0 0.0
    %154 = vmatpush1.msra.mxu0 0.0
    %155 = vmatprep.subr.mxu0 0.0
    %156 = vmatpush1.msra.mxu0 0.0
    %157 = vmatprep.subr.mxu0 0.0
    %158 = vmatpush1.msra.mxu0 0.0
    %159 = vmatprep.subr.mxu0 0.0
    %160 = vmatpush1.msra.mxu0 0.0
    %161 = vmatprep.subr.mxu0 0.0
    %162 = vmatpush1.msra.mxu0 0.0
    %163 = vmatprep.subr.mxu0 0.0
    %164 = vmatpush1.msra.mxu0 0.0
    %165 = vmatprep.subr.mxu0 0.0
    %166 = vmatpush1.msra.mxu0 0.0
    %167 = vmatprep.subr.mxu0 0.0
    %168 = vmatpush1.msra.mxu0 0.0
    %169 = vmatprep.subr.mxu0 0.0
    %170 = vmatpush1.msra.mxu0 0.0
    %171 = vmatprep.subr.mxu0 0.0
    %172 = vmatpush1.msra.mxu0 0.0
    %173 = vmatprep.subr.mxu0 0.0
    %174 = vmatpush1.msra.mxu0 0.0
    %175 = vmatprep.subr.mxu0 0.0
    %176 = vmatpush1.msra.mxu0 0.0
    %177 = vmatprep.subr.mxu0 0.0
    %178 = vmatpush1.msra.mxu0 0.0
    %179 = vmatprep.subr.mxu0 0.0
    %180 = vmatpush1.msra.mxu0 0.0
    %181 = vmatprep.subr.mxu0 0.0
    %182 = vmatpush1.msra.mxu0 0.0
    %183 = vmatprep.mubr.f32.mxu0 0.0
    %184 = vmatmul.mubr.f32.gmra.mrb[0].mxu0 %v111
    %v185 = vpop.f32.mrb[0].mxu0
    %v186 = vadd.f32 0.0, %v185
    %v187 = vpop.f32.mrb[0].mxu0
    %188 = vmatprep.mubr.f32.mxu0 0.0
    %189 = vmatmul.mubr.f32.gmra.mrb[0].mxu0 %v114
    %v190 = vpop.f32.mrb[0].mxu0
    %v191 = vadd.f32 0.0, %v190
    %v192 = vpop.f32.mrb[0].mxu0
    %193 = vmatprep.mubr.f32.mxu0 0.0
    %194 = vmatmul.mubr.f32.gmra.mrb[0].mxu0 %v117
    %v195 = vpop.f32.mrb[0].mxu0
    %v196 = vadd.f32 0.0, %v195
    %v197 = vpop.f32.mrb[0].mxu0
    %198 = vdwg.mxu0
    %v199 = vld [vmem:[%s1] sm:$0xff]
    %v200 = vld [vmem:[%s1 + $0x8] sm:$0xff]
    %v201 = vld [vmem:[%s1 + $0x10] sm:$0xff]
    %vm202 = vcmp.gt.f32.partialorder %v199, 0.0
    %vm203 = vcmp.gt.f32.partialorder %v200, 0.0
    %vm204 = vcmp.gt.f32.partialorder %v201, 0.0
    %v205 = vsel %vm202, 1, 0
    %v206 = vsel %vm203, 1, 0
    %v207 = vsel %vm204, 1, 0
    %208 = vset.pattern.permute.xlu0 0
    %209 = vperm.xlu0 %208, %v205
    %v210 = vpop.permute.xlu0 %209
    %211 = vset.pattern.permute.xlu0 0
    %212 = vperm.xlu0 %211, %v206
    %v213 = vpop.permute.xlu0 %212
    %214 = vset.pattern.permute.xlu0 0
    %215 = vperm.xlu0 %214, %v207
    %v216 = vpop.permute.xlu0 %215
    %vm217 = vcmp.eq.s32.totalorder %v210, 1
    %vm218 = vcmp.eq.s32.totalorder %v213, 1
    %vm219 = vcmp.eq.s32.totalorder %v216, 1
    %v220 = vsel %vm217, %v186, %v103
    %v221 = vsel %vm218, %v191, %v104
    %v222 = vsel %vm219, %v196, %v105
    %v223 = vld [vmem:[#allocation3] sm:$0xff]
    %v224 = vld [vmem:[#allocation3 + $0x8] sm:$0xff]
    %v225 = vld [vmem:[%s3] sm:$0xff]
    %v226 = vld [vmem:[%s3 + $0x8] sm:$0xff]
    %v227 = vld [vmem:[%s3 + $0x10] sm:$0xff]
    %v228 = vld [vmem:[#allocation5] sm:$0x1f]
    %vm229 = vcmask 39936
    %v231 = vsel %vm229, %v225, 0
    %v234 = vsel %vm229, %v226, 0
    %v237 = vsel %vm229, %v227, 0
    %vm239 = vcmask 1044480
    %v241 = vsel %vm239, %v228, 0
    %243 = vmatprep.subr.mxu0 0.0
    %244 = vmatpush1.msra.mxu0 %v241
    %245 = vmatprep.subr.mxu0 0.0
    %246 = vmatpush1.msra.mxu0 0.0
    %247 = vmatprep.subr.mxu0 0.0
    %248 = vmatpush1.msra.mxu0 0.0
    %249 = vmatprep.subr.mxu0 0.0
    %250 = vmatpush1.msra.mxu0 0.0
    %251 = vmatprep.subr.mxu0 0.0
    %252 = vmatpush1.msra.mxu0 0.0
    %253 = vmatprep.subr.mxu0 0.0
    %254 = vmatpush1.msra.mxu0 0.0
    %255 = vmatprep.subr.mxu0 0.0
    %256 = vmatpush1.msra.mxu0 0.0
    %257 = vmatprep.subr.mxu0 0.0
    %258 = vmatpush1.msra.mxu0 0.0
    %259 = vmatprep.subr.mxu0 0.0
    %260 = vmatpush1.msra.mxu0 0.0
    %261 = vmatprep.subr.mxu0 0.0
    %262 = vmatpush1.msra.mxu0 0.0
    %263 = vmatprep.subr.mxu0 0.0
    %264 = vmatpush1.msra.mxu0 0.0
    %265 = vmatprep.subr.mxu0 0.0
    %266 = vmatpush1.msra.mxu0 0.0
    %267 = vmatprep.subr.mxu0 0.0
    %268 = vmatpush1.msra.mxu0 0.0
    %269 = vmatprep.subr.mxu0 0.0
    %270 = vmatpush1.msra.mxu0 0.0
    %271 = vmatprep.subr.mxu0 0.0
    %272 = vmatpush1.msra.mxu0 0.0
    %273 = vmatprep.subr.mxu0 0.0
    %274 = vmatpush1.msra.mxu0 0.0
    %275 = vmatprep.subr.mxu0 0.0
    %276 = vmatpush1.msra.mxu0 0.0
    %277 = vmatprep.subr.mxu0 0.0
    %278 = vmatpush1.msra.mxu0 0.0
    %279 = vmatprep.subr.mxu0 0.0
    %280 = vmatpush1.msra.mxu0 0.0
    %281 = vmatprep.subr.mxu0 0.0
    %282 = vmatpush1.msra.mxu0 0.0
    %283 = vmatprep.subr.mxu0 0.0
    %284 = vmatpush1.msra.mxu0 0.0
    %285 = vmatprep.subr.mxu0 0.0
    %286 = vmatpush1.msra.mxu0 0.0
    %287 = vmatprep.subr.mxu0 0.0
    %288 = vmatpush1.msra.mxu0 0.0
    %289 = vmatprep.subr.mxu0 0.0
    %290 = vmatpush1.msra.mxu0 0.0
    %291 = vmatprep.subr.mxu0 0.0
    %292 = vmatpush1.msra.mxu0 0.0
    %293 = vmatprep.subr.mxu0 0.0
    %294 = vmatpush1.msra.mxu0 0.0
    %295 = vmatprep.subr.mxu0 0.0
    %296 = vmatpush1.msra.mxu0 0.0
    %297 = vmatprep.subr.mxu0 0.0
    %298 = vmatpush1.msra.mxu0 0.0
    %299 = vmatprep.subr.mxu0 0.0
    %300 = vmatpush1.msra.mxu0 0.0
    %301 = vmatprep.subr.mxu0 0.0
    %302 = vmatpush1.msra.mxu0 0.0
    %303 = vmatprep.subr.mxu0 0.0
    %304 = vmatpush1.msra.mxu0 0.0
    %305 = vmatprep.subr.mxu0 0.0
    %306 = vmatpush1.msra.mxu0 0.0
    %307 = vmatprep.mubr.f32.mxu0 0.0
    %308 = vmatmul.mubr.f32.gmra.mrb[0].mxu0 %v231
    %v309 = vpop.f32.mrb[0].mxu0
    %v310 = vadd.f32 0.0, %v309
    %v311 = vpop.f32.mrb[0].mxu0
    %312 = vmatprep.mubr.f32.mxu0 0.0
    %313 = vmatmul.mubr.f32.gmra.mrb[0].mxu0 %v234
    %v314 = vpop.f32.mrb[0].mxu0
    %v315 = vadd.f32 0.0, %v314
    %v316 = vpop.f32.mrb[0].mxu0
    %317 = vmatprep.mubr.f32.mxu0 0.0
    %318 = vmatmul.mubr.f32.gmra.mrb[0].mxu0 %v237
    %v319 = vpop.f32.mrb[0].mxu0
    %v320 = vadd.f32 0.0, %v319
    %v321 = vpop.f32.mrb[0].mxu0
    %322 = vdwg.mxu0
    %vm323 = vcmask 130048
    %v325 = vsel %vm323, %v220, 0
    %v328 = vsel %vm323, %v221, 0
    %v331 = vsel %vm323, %v222, 0
    %333 = vmatprep.subr.mxu0 0.0
    %334 = vmatpush1.msra.mxu0 %v223
    %335 = vmatprep.subr.mxu0 0.0
    %336 = vmatpush1.msra.mxu0 %v224
    %337 = vmatprep.subr.mxu0 0.0
    %338 = vmatpush1.msra.mxu0 0.0
    %339 = vmatprep.subr.mxu0 0.0
    %340 = vmatpush1.msra.mxu0 0.0
    %341 = vmatprep.subr.mxu0 0.0
    %342 = vmatpush1.msra.mxu0 0.0
    %343 = vmatprep.subr.mxu0 0.0
    %344 = vmatpush1.msra.mxu0 0.0
    %345 = vmatprep.subr.mxu0 0.0
    %346 = vmatpush1.msra.mxu0 0.0
    %347 = vmatprep.subr.mxu0 0.0
    %348 = vmatpush1.msra.mxu0 0.0
    %349 = vmatprep.subr.mxu0 0.0
    %350 = vmatpush1.msra.mxu0 0.0
    %351 = vmatprep.subr.mxu0 0.0
    %352 = vmatpush1.msra.mxu0 0.0
    %353 = vmatprep.subr.mxu0 0.0
    %354 = vmatpush1.msra.mxu0 0.0
    %355 = vmatprep.subr.mxu0 0.0
    %356 = vmatpush1.msra.mxu0 0.0
    %357 = vmatprep.subr.mxu0 0.0
    %358 = vmatpush1.msra.mxu0 0.0
    %359 = vmatprep.subr.mxu0 0.0
    %360 = vmatpush1.msra.mxu0 0.0
    %361 = vmatprep.subr.mxu0 0.0
    %362 = vmatpush1.msra.mxu0 0.0
    %363 = vmatprep.subr.mxu0 0.0
    %364 = vmatpush1.msra.mxu0 0.0
    %365 = vmatprep.subr.mxu0 0.0
    %366 = vmatpush1.msra.mxu0 0.0
    %367 = vmatprep.subr.mxu0 0.0
    %368 = vmatpush1.msra.mxu0 0.0
    %369 = vmatprep.subr.mxu0 0.0
    %370 = vmatpush1.msra.mxu0 0.0
    %371 = vmatprep.subr.mxu0 0.0
    %372 = vmatpush1.msra.mxu0 0.0
    %373 = vmatprep.subr.mxu0 0.0
    %374 = vmatpush1.msra.mxu0 0.0
    %375 = vmatprep.subr.mxu0 0.0
    %376 = vmatpush1.msra.mxu0 0.0
    %377 = vmatprep.subr.mxu0 0.0
    %378 = vmatpush1.msra.mxu0 0.0
    %379 = vmatprep.subr.mxu0 0.0
    %380 = vmatpush1.msra.mxu0 0.0
    %381 = vmatprep.subr.mxu0 0.0
    %382 = vmatpush1.msra.mxu0 0.0
    %383 = vmatprep.subr.mxu0 0.0
    %384 = vmatpush1.msra.mxu0 0.0
    %385 = vmatprep.subr.mxu0 0.0
    %386 = vmatpush1.msra.mxu0 0.0
    %387 = vmatprep.subr.mxu0 0.0
    %388 = vmatpush1.msra.mxu0 0.0
    %389 = vmatprep.subr.mxu0 0.0
    %390 = vmatpush1.msra.mxu0 0.0
    %391 = vmatprep.subr.mxu0 0.0
    %392 = vmatpush1.msra.mxu0 0.0
    %393 = vmatprep.subr.mxu0 0.0
    %394 = vmatpush1.msra.mxu0 0.0
    %395 = vmatprep.subr.mxu0 0.0
    %396 = vmatpush1.msra.mxu0 0.0
    %397 = vmatprep.mubr.f32.mxu0 0.0
    %398 = vmatmul.mubr.f32.gmra.mrb[0].mxu0 %v325
    %v399 = vpop.f32.mrb[0].mxu0
    %v400 = vadd.f32 %v310, %v399
    %v401 = vpop.f32.mrb[0].mxu0
    %402 = vmatprep.mubr.f32.mxu0 0.0
    %403 = vmatmul.mubr.f32.gmra.mrb[0].mxu0 %v328
    %v404 = vpop.f32.mrb[0].mxu0
    %v405 = vadd.f32 %v315, %v404
    %v406 = vpop.f32.mrb[0].mxu0
    %407 = vmatprep.mubr.f32.mxu0 0.0
    %408 = vmatmul.mubr.f32.gmra.mrb[0].mxu0 %v331
    %v409 = vpop.f32.mrb[0].mxu0
    %v410 = vadd.f32 %v320, %v409
    %v411 = vpop.f32.mrb[0].mxu0
    %412 = vdwg.mxu0
    %v413 = vld [vmem:[#allocation7] sm:$0x1]
    %v415 = vlaneseq
    %v416 = vshrl.u32 %v415, 7
    %v417 = vsub.s32 0, %v416
    %v418 = vrot.slane %v413, %v417
    %v420 = vadd.f32 %v400, %v418
    %v421 = vadd.f32 %v405, %v418
    %v422 = vadd.f32 %v410, %v418
    %v423 = vld [vmem:[%s8] sm:$0xff]
    %v424 = vld [vmem:[%s8 + $0x8] sm:$0xff]
    %v425 = vld [vmem:[%s8 + $0x10] sm:$0xff]
    %v426 = vld [vmem:[%s8 + $0x18] sm:$0xff]
    %vm427 = vcmask 261120
    %v429 = vsel %vm427, %v420, 0
    %v432 = vsel %vm427, %v421, 0
    %v435 = vsel %vm427, %v422, 0
    %437 = vmatprep.subr.mxu0 0.0
    %438 = vmatpush1.msra.mxu0 %v423
    %439 = vmatprep.subr.mxu0 0.0
    %440 = vmatpush1.msra.mxu0 %v424
    %441 = vmatprep.subr.mxu0 0.0
    %442 = vmatpush1.msra.mxu0 %v425
    %443 = vmatprep.subr.mxu0 0.0
    %444 = vmatpush1.msra.mxu0 %v426
    %445 = vmatprep.subr.mxu0 0.0
    %446 = vmatpush1.msra.mxu0 0.0
    %447 = vmatprep.subr.mxu0 0.0
    %448 = vmatpush1.msra.mxu0 0.0
    %449 = vmatprep.subr.mxu0 0.0
    %450 = vmatpush1.msra.mxu0 0.0
    %451 = vmatprep.subr.mxu0 0.0
    %452 = vmatpush1.msra.mxu0 0.0
    %453 = vmatprep.subr.mxu0 0.0
    %454 = vmatpush1.msra.mxu0 0.0
    %455 = vmatprep.subr.mxu0 0.0
    %456 = vmatpush1.msra.mxu0 0.0
    %457 = vmatprep.subr.mxu0 0.0
    %458 = vmatpush1.msra.mxu0 0.0
    %459 = vmatprep.subr.mxu0 0.0
    %460 = vmatpush1.msra.mxu0 0.0
    %461 = vmatprep.subr.mxu0 0.0
    %462 = vmatpush1.msra.mxu0 0.0
    %463 = vmatprep.subr.mxu0 0.0
    %464 = vmatpush1.msra.mxu0 0.0
    %465 = vmatprep.subr.mxu0 0.0
    %466 = vmatpush1.msra.mxu0 0.0
    %467 = vmatprep.subr.mxu0 0.0
    %468 = vmatpush1.msra.mxu0 0.0
    %469 = vmatprep.subr.mxu0 0.0
    %470 = vmatpush1.msra.mxu0 0.0
    %471 = vmatprep.subr.mxu0 0.0
    %472 = vmatpush1.msra.mxu0 0.0
    %473 = vmatprep.subr.mxu0 0.0
    %474 = vmatpush1.msra.mxu0 0.0
    %475 = vmatprep.subr.mxu0 0.0
    %476 = vmatpush1.msra.mxu0 0.0
    %477 = vmatprep.subr.mxu0 0.0
    %478 = vmatpush1.msra.mxu0 0.0
    %479 = vmatprep.subr.mxu0 0.0
    %480 = vmatpush1.msra.mxu0 0.0
    %481 = vmatprep.subr.mxu0 0.0
    %482 = vmatpush1.msra.mxu0 0.0
    %483 = vmatprep.subr.mxu0 0.0
    %484 = vmatpush1.msra.mxu0 0.0
    %485 = vmatprep.subr.mxu0 0.0
    %486 = vmatpush1.msra.mxu0 0.0
    %487 = vmatprep.subr.mxu0 0.0
    %488 = vmatpush1.msra.mxu0 0.0
    %489 = vmatprep.subr.mxu0 0.0
    %490 = vmatpush1.msra.mxu0 0.0
    %491 = vmatprep.subr.mxu0 0.0
    %492 = vmatpush1.msra.mxu0 0.0
    %493 = vmatprep.subr.mxu0 0.0
    %494 = vmatpush1.msra.mxu0 0.0
    %495 = vmatprep.subr.mxu0 0.0
    %496 = vmatpush1.msra.mxu0 0.0
    %497 = vmatprep.subr.mxu0 0.0
    %498 = vmatpush1.msra.mxu0 0.0
    %499 = vmatprep.subr.mxu0 0.0
    %500 = vmatpush1.msra.mxu0 0.0
    %501 = vmatprep.mubr.f32.mxu0 0.0
    %502 = vmatmul.mubr.f32.gmra.mrb[0].mxu0 %v429
    %v503 = vpop.f32.mrb[0].mxu0
    %v504 = vadd.f32 0.0, %v503
    %v505 = vpop.f32.mrb[0].mxu0
    %506 = vmatprep.mubr.f32.mxu0 0.0
    %507 = vmatmul.mubr.f32.gmra.mrb[0].mxu0 %v432
    %v508 = vpop.f32.mrb[0].mxu0
    %v509 = vadd.f32 0.0, %v508
    %v510 = vpop.f32.mrb[0].mxu0
    %511 = vmatprep.mubr.f32.mxu0 0.0
    %512 = vmatmul.mubr.f32.gmra.mrb[0].mxu0 %v435
    %v513 = vpop.f32.mrb[0].mxu0
    %v514 = vadd.f32 0.0, %v513
    %v515 = vpop.f32.mrb[0].mxu0
    %516 = vdwg.mxu0
    %v517 = vld [vmem:[%s9] sm:$0x1]
    %v519 = vlaneseq
    %v520 = vshrl.u32 %v519, 7
    %v521 = vsub.s32 0, %v520
    %v522 = vrot.slane %v517, %v521
    %v524 = vadd.f32 %v504, %v522
    %v525 = vadd.f32 %v509, %v522
    %v526 = vadd.f32 %v514, %v522
    %530 = vrot.lane.b32.xlu0 %v504, 96
    %v531 = vpop.permute.xlu0 %530
    %532 = vrot.lane.b32.xlu0 %v509, 96
    %v533 = vpop.permute.xlu0 %532
    %534 = vrot.lane.b32.xlu0 %v514, 96
    %v535 = vpop.permute.xlu0 %534
    %v536 = vld [vmem:[#allocation8] sm:$0xff]
    %v537 = vld [vmem:[#allocation8 + $0x8] sm:$0xff]
    %v538 = vld [vmem:[#allocation8 + $0x10] sm:$0xff]
    %539 = vrot.lane.b32.xlu0 %v531, 96
    %v540 = vpop.permute.xlu0 %539
    %541 = vrot.lane.b32.xlu0 %v533, 96
    %v542 = vpop.permute.xlu0 %541
    %543 = vrot.lane.b32.xlu0 %v535, 96
    %v544 = vpop.permute.xlu0 %543
    %vm551 = vcmask 392192
    %v553 = vsel %vm551, %v536, 0
    %v556 = vsel %vm551, %v537, 0
    %v559 = vsel %vm551, %v538, 0
    %561 = vmatprep.subr.mxu0 0.0
    %562 = vmatpush1.msra.mxu0 %v531
    %563 = vmatprep.subr.mxu0 0.0
    %564 = vmatpush1.msra.mxu0 %v533
    %565 = vmatprep.subr.mxu0 0.0
    %566 = vmatpush1.msra.mxu0 %v535
    %567 = vmatprep.subr.mxu0 0.0
    %568 = vmatpush1.msra.mxu0 %v540
    %569 = vmatprep.subr.mxu0 0.0
    %570 = vmatpush1.msra.mxu0 %v542
    %571 = vmatprep.subr.mxu0 0.0
    %572 = vmatpush1.msra.mxu0 %v544
    %573 = vmatprep.subr.mxu0 0.0
    %574 = vmatpush1.msra.mxu0 0.0
    %575 = vmatprep.subr.mxu0 0.0
    %576 = vmatpush1.msra.mxu0 0.0
    %577 = vmatprep.subr.mxu0 0.0
    %578 = vmatpush1.msra.mxu0 0.0
    %579 = vmatprep.subr.mxu0 0.0
    %580 = vmatpush1.msra.mxu0 0.0
    %581 = vmatprep.subr.mxu0 0.0
    %582 = vmatpush1.msra.mxu0 0.0
    %583 = vmatprep.subr.mxu0 0.0
    %584 = vmatpush1.msra.mxu0 0.0
    %585 = vmatprep.subr.mxu0 0.0
    %586 = vmatpush1.msra.mxu0 0.0
    %587 = vmatprep.subr.mxu0 0.0
    %588 = vmatpush1.msra.mxu0 0.0
    %589 = vmatprep.subr.mxu0 0.0
    %590 = vmatpush1.msra.mxu0 0.0
    %591 = vmatprep.subr.mxu0 0.0
    %592 = vmatpush1.msra.mxu0 0.0
    %593 = vmatprep.subr.mxu0 0.0
    %594 = vmatpush1.msra.mxu0 0.0
    %595 = vmatprep.subr.mxu0 0.0
    %596 = vmatpush1.msra.mxu0 0.0
    %597 = vmatprep.subr.mxu0 0.0
    %598 = vmatpush1.msra.mxu0 0.0
    %599 = vmatprep.subr.mxu0 0.0
    %600 = vmatpush1.msra.mxu0 0.0
    %601 = vmatprep.subr.mxu0 0.0
    %602 = vmatpush1.msra.mxu0 0.0
    %603 = vmatprep.subr.mxu0 0.0
    %604 = vmatpush1.msra.mxu0 0.0
    %605 = vmatprep.subr.mxu0 0.0
    %606 = vmatpush1.msra.mxu0 0.0
    %607 = vmatprep.subr.mxu0 0.0
    %608 = vmatpush1.msra.mxu0 0.0
    %609 = vmatprep.subr.mxu0 0.0
    %610 = vmatpush1.msra.mxu0 0.0
    %611 = vmatprep.subr.mxu0 0.0
    %612 = vmatpush1.msra.mxu0 0.0
    %613 = vmatprep.subr.mxu0 0.0
    %614 = vmatpush1.msra.mxu0 0.0
    %615 = vmatprep.subr.mxu0 0.0
    %616 = vmatpush1.msra.mxu0 0.0
    %617 = vmatprep.subr.mxu0 0.0
    %618 = vmatpush1.msra.mxu0 0.0
    %619 = vmatprep.subr.mxu0 0.0
    %620 = vmatpush1.msra.mxu0 0.0
    %621 = vmatprep.subr.mxu0 0.0
    %622 = vmatpush1.msra.mxu0 0.0
    %623 = vmatprep.subr.mxu0 0.0
    %624 = vmatpush1.msra.mxu0 0.0
    %625 = vmatprep.mubr.f32.mxu0 0.0
    %626 = vmatmul.mubr.f32.gmra.mrb[0].mxu0 %v553
    %v627 = vpop.f32.mrb[0].mxu0
    %v628 = vadd.f32 0.0, %v627
    %v629 = vpop.f32.mrb[0].mxu0
    %630 = vmatprep.mubr.f32.mxu0 0.0
    %631 = vmatmul.mubr.f32.gmra.mrb[0].mxu0 %v556
    %v632 = vpop.f32.mrb[0].mxu0
    %v633 = vadd.f32 0.0, %v632
    %v634 = vpop.f32.mrb[0].mxu0
    %635 = vmatprep.mubr.f32.mxu0 0.0
    %636 = vmatmul.mubr.f32.gmra.mrb[0].mxu0 %v559
    %v637 = vpop.f32.mrb[0].mxu0
    %v638 = vadd.f32 0.0, %v637
    %v639 = vpop.f32.mrb[0].mxu0
    %640 = vdwg.mxu0
    %v641 = vadd.f32 %v524, %v628
    %v642 = vadd.f32 %v525, %v633
    %v643 = vadd.f32 %v526, %v638
    %v644 = vmax.f32 %v641, 0.0
    %v645 = vmax.f32 %v642, 0.0
    %v646 = vmax.f32 %v643, 0.0
    %v647 = vadd.f32 %v644, %v420
    %v648 = vadd.f32 %v645, %v421
    %v649 = vadd.f32 %v646, %v422
    %s650 = scalar_lea.vmem %s8, 32
    %v651 = vld [vmem:[%s650] sm:$0xff]
    %v652 = vld [vmem:[%s650 + $0x8] sm:$0xff]
    %v653 = vld [vmem:[%s650 + $0x10] sm:$0xff]
    %v654 = vld [vmem:[%s650 + $0x18] sm:$0xff]
    %v656 = vsel %vm427, %v647, 0
    %v659 = vsel %vm427, %v648, 0
    %v662 = vsel %vm427, %v649, 0
    %664 = vmatprep.subr.mxu0 0.0
    %665 = vmatpush1.msra.mxu0 %v651
    %666 = vmatprep.subr.mxu0 0.0
    %667 = vmatpush1.msra.mxu0 %v652
    %668 = vmatprep.subr.mxu0 0.0
    %669 = vmatpush1.msra.mxu0 %v653
    %670 = vmatprep.subr.mxu0 0.0
    %671 = vmatpush1.msra.mxu0 %v654
    %672 = vmatprep.subr.mxu0 0.0
    %673 = vmatpush1.msra.mxu0 0.0
    %674 = vmatprep.subr.mxu0 0.0
    %675 = vmatpush1.msra.mxu0 0.0
    %676 = vmatprep.subr.mxu0 0.0
    %677 = vmatpush1.msra.mxu0 0.0
    %678 = vmatprep.subr.mxu0 0.0
    %679 = vmatpush1.msra.mxu0 0.0
    %680 = vmatprep.subr.mxu0 0.0
    %681 = vmatpush1.msra.mxu0 0.0
    %682 = vmatprep.subr.mxu0 0.0
    %683 = vmatpush1.msra.mxu0 0.0
    %684 = vmatprep.subr.mxu0 0.0
    %685 = vmatpush1.msra.mxu0 0.0
    %686 = vmatprep.subr.mxu0 0.0
    %687 = vmatpush1.msra.mxu0 0.0
    %688 = vmatprep.subr.mxu0 0.0
    %689 = vmatpush1.msra.mxu0 0.0
    %690 = vmatprep.subr.mxu0 0.0
    %691 = vmatpush1.msra.mxu0 0.0
    %692 = vmatprep.subr.mxu0 0.0
    %693 = vmatpush1.msra.mxu0 0.0
    %694 = vmatprep.subr.mxu0 0.0
    %695 = vmatpush1.msra.mxu0 0.0
    %696 = vmatprep.subr.mxu0 0.0
    %697 = vmatpush1.msra.mxu0 0.0
    %698 = vmatprep.subr.mxu0 0.0
    %699 = vmatpush1.msra.mxu0 0.0
    %700 = vmatprep.subr.mxu0 0.0
    %701 = vmatpush1.msra.mxu0 0.0
    %702 = vmatprep.subr.mxu0 0.0
    %703 = vmatpush1.msra.mxu0 0.0
    %704 = vmatprep.subr.mxu0 0.0
    %705 = vmatpush1.msra.mxu0 0.0
    %706 = vmatprep.subr.mxu0 0.0
    %707 = vmatpush1.msra.mxu0 0.0
    %708 = vmatprep.subr.mxu0 0.0
    %709 = vmatpush1.msra.mxu0 0.0
    %710 = vmatprep.subr.mxu0 0.0
    %711 = vmatpush1.msra.mxu0 0.0
    %712 = vmatprep.subr.mxu0 0.0
    %713 = vmatpush1.msra.mxu0 0.0
    %714 = vmatprep.subr.mxu0 0.0
    %715 = vmatpush1.msra.mxu0 0.0
    %716 = vmatprep.subr.mxu0 0.0
    %717 = vmatpush1.msra.mxu0 0.0
    %718 = vmatprep.subr.mxu0 0.0
    %719 = vmatpush1.msra.mxu0 0.0
    %720 = vmatprep.subr.mxu0 0.0
    %721 = vmatpush1.msra.mxu0 0.0
    %722 = vmatprep.subr.mxu0 0.0
    %723 = vmatpush1.msra.mxu0 0.0
    %724 = vmatprep.subr.mxu0 0.0
    %725 = vmatpush1.msra.mxu0 0.0
    %726 = vmatprep.subr.mxu0 0.0
    %727 = vmatpush1.msra.mxu0 0.0
    %728 = vmatprep.mubr.f32.mxu0 0.0
    %729 = vmatmul.mubr.f32.gmra.mrb[0].mxu0 %v656
    %v730 = vpop.f32.mrb[0].mxu0
    %v731 = vadd.f32 0.0, %v730
    %v732 = vpop.f32.mrb[0].mxu0
    %733 = vmatprep.mubr.f32.mxu0 0.0
    %734 = vmatmul.mubr.f32.gmra.mrb[0].mxu0 %v659
    %v735 = vpop.f32.mrb[0].mxu0
    %v736 = vadd.f32 0.0, %v735
    %v737 = vpop.f32.mrb[0].mxu0
    %738 = vmatprep.mubr.f32.mxu0 0.0
    %739 = vmatmul.mubr.f32.gmra.mrb[0].mxu0 %v662
    %v740 = vpop.f32.mrb[0].mxu0
    %v741 = vadd.f32 0.0, %v740
    %v742 = vpop.f32.mrb[0].mxu0
    %743 = vdwg.mxu0
    %s744 = scalar_lea.vmem %s9, 1
    %v745 = vld [vmem:[%s744] sm:$0x1]
    %v747 = vlaneseq
    %v748 = vshrl.u32 %v747, 7
    %v749 = vsub.s32 0, %v748
    %v750 = vrot.slane %v745, %v749
    %v752 = vadd.f32 %v731, %v750
    %v753 = vadd.f32 %v736, %v750
    %v754 = vadd.f32 %v741, %v750
    %758 = vrot.lane.b32.xlu0 %v731, 96
    %v759 = vpop.permute.xlu0 %758
    %760 = vrot.lane.b32.xlu0 %v736, 96
    %v761 = vpop.permute.xlu0 %760
    %762 = vrot.lane.b32.xlu0 %v741, 96
    %v763 = vpop.permute.xlu0 %762
    %764 = vrot.lane.b32.xlu0 %v759, 96
    %v765 = vpop.permute.xlu0 %764
    %766 = vrot.lane.b32.xlu0 %v761, 96
    %v767 = vpop.permute.xlu0 %766
    %768 = vrot.lane.b32.xlu0 %v763, 96
    %v769 = vpop.permute.xlu0 %768
    %776 = vmatprep.subr.mxu0 0.0
    %777 = vmatpush1.msra.mxu0 %v759
    %778 = vmatprep.subr.mxu0 0.0
    %779 = vmatpush1.msra.mxu0 %v761
    %780 = vmatprep.subr.mxu0 0.0
    %781 = vmatpush1.msra.mxu0 %v763
    %782 = vmatprep.subr.mxu0 0.0
    %783 = vmatpush1.msra.mxu0 %v765
    %784 = vmatprep.subr.mxu0 0.0
    %785 = vmatpush1.msra.mxu0 %v767
    %786 = vmatprep.subr.mxu0 0.0
    %787 = vmatpush1.msra.mxu0 %v769
    %788 = vmatprep.subr.mxu0 0.0
    %789 = vmatpush1.msra.mxu0 0.0
    %790 = vmatprep.subr.mxu0 0.0
    %791 = vmatpush1.msra.mxu0 0.0
    %792 = vmatprep.subr.mxu0 0.0
    %793 = vmatpush1.msra.mxu0 0.0
    %794 = vmatprep.subr.mxu0 0.0
    %795 = vmatpush1.msra.mxu0 0.0
    %796 = vmatprep.subr.mxu0 0.0
    %797 = vmatpush1.msra.mxu0 0.0
    %798 = vmatprep.subr.mxu0 0.0
    %799 = vmatpush1.msra.mxu0 0.0
    %800 = vmatprep.subr.mxu0 0.0
    %801 = vmatpush1.msra.mxu0 0.0
    %802 = vmatprep.subr.mxu0 0.0
    %803 = vmatpush1.msra.mxu0 0.0
    %804 = vmatprep.subr.mxu0 0.0
    %805 = vmatpush1.msra.mxu0 0.0
    %806 = vmatprep.subr.mxu0 0.0
    %807 = vmatpush1.msra.mxu0 0.0
    %808 = vmatprep.subr.mxu0 0.0
    %809 = vmatpush1.msra.mxu0 0.0
    %810 = vmatprep.subr.mxu0 0.0
    %811 = vmatpush1.msra.mxu0 0.0
    %812 = vmatprep.subr.mxu0 0.0
    %813 = vmatpush1.msra.mxu0 0.0
    %814 = vmatprep.subr.mxu0 0.0
    %815 = vmatpush1.msra.mxu0 0.0
    %816 = vmatprep.subr.mxu0 0.0
    %817 = vmatpush1.msra.mxu0 0.0
    %818 = vmatprep.subr.mxu0 0.0
    %819 = vmatpush1.msra.mxu0 0.0
    %820 = vmatprep.subr.mxu0 0.0
    %821 = vmatpush1.msra.mxu0 0.0
    %822 = vmatprep.subr.mxu0 0.0
    %823 = vmatpush1.msra.mxu0 0.0
    %824 = vmatprep.subr.mxu0 0.0
    %825 = vmatpush1.msra.mxu0 0.0
    %826 = vmatprep.subr.mxu0 0.0
    %827 = vmatpush1.msra.mxu0 0.0
    %828 = vmatprep.subr.mxu0 0.0
    %829 = vmatpush1.msra.mxu0 0.0
    %830 = vmatprep.subr.mxu0 0.0
    %831 = vmatpush1.msra.mxu0 0.0
    %832 = vmatprep.subr.mxu0 0.0
    %833 = vmatpush1.msra.mxu0 0.0
    %834 = vmatprep.subr.mxu0 0.0
    %835 = vmatpush1.msra.mxu0 0.0
    %836 = vmatprep.subr.mxu0 0.0
    %837 = vmatpush1.msra.mxu0 0.0
    %838 = vmatprep.subr.mxu0 0.0
    %839 = vmatpush1.msra.mxu0 0.0
    %840 = vmatprep.mubr.f32.mxu0 0.0
    %841 = vmatmul.mubr.f32.gmra.mrb[0].mxu0 %v553
    %v842 = vpop.f32.mrb[0].mxu0
    %v843 = vadd.f32 0.0, %v842
    %v844 = vpop.f32.mrb[0].mxu0
    %845 = vmatprep.mubr.f32.mxu0 0.0
    %846 = vmatmul.mubr.f32.gmra.mrb[0].mxu0 %v556
    %v847 = vpop.f32.mrb[0].mxu0
    %v848 = vadd.f32 0.0, %v847
    %v849 = vpop.f32.mrb[0].mxu0
    %850 = vmatprep.mubr.f32.mxu0 0.0
    %851 = vmatmul.mubr.f32.gmra.mrb[0].mxu0 %v559
    %v852 = vpop.f32.mrb[0].mxu0
    %v853 = vadd.f32 0.0, %v852
    %v854 = vpop.f32.mrb[0].mxu0
    %855 = vdwg.mxu0
    %v856 = vadd.f32 %v752, %v843
    %v857 = vadd.f32 %v753, %v848
    %v858 = vadd.f32 %v754, %v853
    %v859 = vmax.f32 %v856, 0.0
    %v860 = vmax.f32 %v857, 0.0
    %v861 = vmax.f32 %v858, 0.0
    %v862 = vld [vmem:[%s10] sm:$0xff]
    %v864 = vsel %vm109, %v862, 0
    %866 = vmatprep.subr.mxu0 0.0
    %867 = vmatpush1.msra.mxu0 %v859
    %868 = vmatprep.subr.mxu0 0.0
    %869 = vmatpush1.msra.mxu0 %v860
    %870 = vmatprep.subr.mxu0 0.0
    %871 = vmatpush1.msra.mxu0 %v861
    %872 = vmatprep.subr.mxu0 0.0
    %873 = vmatpush1.msra.mxu0 0.0
    %874 = vmatprep.subr.mxu0 0.0
    %875 = vmatpush1.msra.mxu0 0.0
    %876 = vmatprep.subr.mxu0 0.0
    %877 = vmatpush1.msra.mxu0 0.0
    %878 = vmatprep.subr.mxu0 0.0
    %879 = vmatpush1.msra.mxu0 0.0
    %880 = vmatprep.subr.mxu0 0.0
    %881 = vmatpush1.msra.mxu0 0.0
    %882 = vmatprep.subr.mxu0 0.0
    %883 = vmatpush1.msra.mxu0 0.0
    %884 = vmatprep.subr.mxu0 0.0
    %885 = vmatpush1.msra.mxu0 0.0
    %886 = vmatprep.subr.mxu0 0.0
    %887 = vmatpush1.msra.mxu0 0.0
    %888 = vmatprep.subr.mxu0 0.0
    %889 = vmatpush1.msra.mxu0 0.0
    %890 = vmatprep.subr.mxu0 0.0
    %891 = vmatpush1.msra.mxu0 0.0
    %892 = vmatprep.subr.mxu0 0.0
    %893 = vmatpush1.msra.mxu0 0.0
    %894 = vmatprep.subr.mxu0 0.0
    %895 = vmatpush1.msra.mxu0 0.0
    %896 = vmatprep.subr.mxu0 0.0
    %897 = vmatpush1.msra.mxu0 0.0
    %898 = vmatprep.subr.mxu0 0.0
    %899 = vmatpush1.msra.mxu0 0.0
    %900 = vmatprep.subr.mxu0 0.0
    %901 = vmatpush1.msra.mxu0 0.0
    %902 = vmatprep.subr.mxu0 0.0
    %903 = vmatpush1.msra.mxu0 0.0
    %904 = vmatprep.subr.mxu0 0.0
    %905 = vmatpush1.msra.mxu0 0.0
    %906 = vmatprep.subr.mxu0 0.0
    %907 = vmatpush1.msra.mxu0 0.0
    %908 = vmatprep.subr.mxu0 0.0
    %909 = vmatpush1.msra.mxu0 0.0
    %910 = vmatprep.subr.mxu0 0.0
    %911 = vmatpush1.msra.mxu0 0.0
    %912 = vmatprep.subr.mxu0 0.0
    %913 = vmatpush1.msra.mxu0 0.0
    %914 = vmatprep.subr.mxu0 0.0
    %915 = vmatpush1.msra.mxu0 0.0
    %916 = vmatprep.subr.mxu0 0.0
    %917 = vmatpush1.msra.mxu0 0.0
    %918 = vmatprep.subr.mxu0 0.0
    %919 = vmatpush1.msra.mxu0 0.0
    %920 = vmatprep.subr.mxu0 0.0
    %921 = vmatpush1.msra.mxu0 0.0
    %922 = vmatprep.subr.mxu0 0.0
    %923 = vmatpush1.msra.mxu0 0.0
    %924 = vmatprep.subr.mxu0 0.0
    %925 = vmatpush1.msra.mxu0 0.0
    %926 = vmatprep.subr.mxu0 0.0
    %927 = vmatpush1.msra.mxu0 0.0
    %928 = vmatprep.subr.mxu0 0.0
    %929 = vmatpush1.msra.mxu0 0.0
    %930 = vmatprep.mubr.f32.mxu0 0.0
    %931 = vmatmul.mubr.f32.gmra.mrb[0].mxu0 %v864
    %v932 = vpop.f32.mrb[0].mxu0
    %v933 = vadd.f32 0.0, %v932
    %v934 = vpop.f32.mrb[0].mxu0
    %935 = vdwg.mxu0
    %v936 = vld [vmem:[%s11] sm:$0xff]
    %vm937 = vcmask 64512
    %v939 = vsel %vm937, %v936, 0
    %941 = vmatprep.subr.mxu0 0.0
    %942 = vmatpush1.msra.mxu0 %v933
    %943 = vmatprep.subr.mxu0 0.0
    %944 = vmatpush1.msra.mxu0 0.0
    %945 = vmatprep.subr.mxu0 0.0
    %946 = vmatpush1.msra.mxu0 0.0
    %947 = vmatprep.subr.mxu0 0.0
    %948 = vmatpush1.msra.mxu0 0.0
    %949 = vmatprep.subr.mxu0 0.0
    %950 = vmatpush1.msra.mxu0 0.0
    %951 = vmatprep.subr.mxu0 0.0
    %952 = vmatpush1.msra.mxu0 0.0
    %953 = vmatprep.subr.mxu0 0.0
    %954 = vmatpush1.msra.mxu0 0.0
    %955 = vmatprep.subr.mxu0 0.0
    %956 = vmatpush1.msra.mxu0 0.0
    %957 = vmatprep.subr.mxu0 0.0
    %958 = vmatpush1.msra.mxu0 0.0
    %959 = vmatprep.subr.mxu0 0.0
    %960 = vmatpush1.msra.mxu0 0.0
    %961 = vmatprep.subr.mxu0 0.0
    %962 = vmatpush1.msra.mxu0 0.0
    %963 = vmatprep.subr.mxu0 0.0
    %964 = vmatpush1.msra.mxu0 0.0
    %965 = vmatprep.subr.mxu0 0.0
    %966 = vmatpush1.msra.mxu0 0.0
    %967 = vmatprep.subr.mxu0 0.0
    %968 = vmatpush1.msra.mxu0 0.0
    %969 = vmatprep.subr.mxu0 0.0
    %970 = vmatpush1.msra.mxu0 0.0
    %971 = vmatprep.subr.mxu0 0.0
    %972 = vmatpush1.msra.mxu0 0.0
    %973 = vmatprep.subr.mxu0 0.0
    %974 = vmatpush1.msra.mxu0 0.0
    %975 = vmatprep.subr.mxu0 0.0
    %976 = vmatpush1.msra.mxu0 0.0
    %977 = vmatprep.subr.mxu0 0.0
    %978 = vmatpush1.msra.mxu0 0.0
    %979 = vmatprep.subr.mxu0 0.0
    %980 = vmatpush1.msra.mxu0 0.0
    %981 = vmatprep.subr.mxu0 0.0
    %982 = vmatpush1.msra.mxu0 0.0
    %983 = vmatprep.subr.mxu0 0.0
    %984 = vmatpush1.msra.mxu0 0.0
    %985 = vmatprep.subr.mxu0 0.0
    %986 = vmatpush1.msra.mxu0 0.0
    %987 = vmatprep.subr.mxu0 0.0
    %988 = vmatpush1.msra.mxu0 0.0
    %989 = vmatprep.subr.mxu0 0.0
    %990 = vmatpush1.msra.mxu0 0.0
    %991 = vmatprep.subr.mxu0 0.0
    %992 = vmatpush1.msra.mxu0 0.0
    %993 = vmatprep.subr.mxu0 0.0
    %994 = vmatpush1.msra.mxu0 0.0
    %995 = vmatprep.subr.mxu0 0.0
    %996 = vmatpush1.msra.mxu0 0.0
    %997 = vmatprep.subr.mxu0 0.0
    %998 = vmatpush1.msra.mxu0 0.0
    %999 = vmatprep.subr.mxu0 0.0
    %1000 = vmatpush1.msra.mxu0 0.0
    %1001 = vmatprep.subr.mxu0 0.0
    %1002 = vmatpush1.msra.mxu0 0.0
    %1003 = vmatprep.subr.mxu0 0.0
    %1004 = vmatpush1.msra.mxu0 0.0
    %1005 = vmatprep.mubr.f32.mxu0 0.0
    %1006 = vmatmul.mubr.f32.gmra.mrb[0].mxu0 %v939
    %v1007 = vpop.f32.mrb[0].mxu0
    %v1008 = vadd.f32 0.0, %v1007
    %v1009 = vpop.f32.mrb[0].mxu0
    %1010 = vdwg.mxu0
    %v1011 = vld [vmem:[%s12] sm:$0xff]
    %v1012 = vld [vmem:[%s12 + $0x8] sm:$0xff]
    %v1013 = vld [vmem:[%s12 + $0x10] sm:$0xff]
    %v1014 = vld [vmem:[%s12 + $0x18] sm:$0xff]
    %v1016 = vsel %vm427, %v933, 0
    %1018 = vmatprep.subr.mxu0 0.0
    %1019 = vmatpush1.msra.mxu0 %v1011
    %1020 = vmatprep.subr.mxu0 0.0
    %1021 = vmatpush1.msra.mxu0 %v1012
    %1022 = vmatprep.subr.mxu0 0.0
    %1023 = vmatpush1.msra.mxu0 %v1013
    %1024 = vmatprep.subr.mxu0 0.0
    %1025 = vmatpush1.msra.mxu0 %v1014
    %1026 = vmatprep.subr.mxu0 0.0
    %1027 = vmatpush1.msra.mxu0 0.0
    %1028 = vmatprep.subr.mxu0 0.0
    %1029 = vmatpush1.msra.mxu0 0.0
    %1030 = vmatprep.subr.mxu0 0.0
    %1031 = vmatpush1.msra.mxu0 0.0
    %1032 = vmatprep.subr.mxu0 0.0
    %1033 = vmatpush1.msra.mxu0 0.0
    %1034 = vmatprep.subr.mxu0 0.0
    %1035 = vmatpush1.msra.mxu0 0.0
    %1036 = vmatprep.subr.mxu0 0.0
    %1037 = vmatpush1.msra.mxu0 0.0
    %1038 = vmatprep.subr.mxu0 0.0
    %1039 = vmatpush1.msra.mxu0 0.0
    %1040 = vmatprep.subr.mxu0 0.0
    %1041 = vmatpush1.msra.mxu0 0.0
    %1042 = vmatprep.subr.mxu0 0.0
    %1043 = vmatpush1.msra.mxu0 0.0
    %1044 = vmatprep.subr.mxu0 0.0
    %1045 = vmatpush1.msra.mxu0 0.0
    %1046 = vmatprep.subr.mxu0 0.0
    %1047 = vmatpush1.msra.mxu0 0.0
    %1048 = vmatprep.subr.mxu0 0.0
    %1049 = vmatpush1.msra.mxu0 0.0
    %1050 = vmatprep.subr.mxu0 0.0
    %1051 = vmatpush1.msra.mxu0 0.0
    %1052 = vmatprep.subr.mxu0 0.0
    %1053 = vmatpush1.msra.mxu0 0.0
    %1054 = vmatprep.subr.mxu0 0.0
    %1055 = vmatpush1.msra.mxu0 0.0
    %1056 = vmatprep.subr.mxu0 0.0
    %1057 = vmatpush1.msra.mxu0 0.0
    %1058 = vmatprep.subr.mxu0 0.0
    %1059 = vmatpush1.msra.mxu0 0.0
    %1060 = vmatprep.subr.mxu0 0.0
    %1061 = vmatpush1.msra.mxu0 0.0
    %1062 = vmatprep.subr.mxu0 0.0
    %1063 = vmatpush1.msra.mxu0 0.0
    %1064 = vmatprep.subr.mxu0 0.0
    %1065 = vmatpush1.msra.mxu0 0.0
    %1066 = vmatprep.subr.mxu0 0.0
    %1067 = vmatpush1.msra.mxu0 0.0
    %1068 = vmatprep.subr.mxu0 0.0
    %1069 = vmatpush1.msra.mxu0 0.0
    %1070 = vmatprep.subr.mxu0 0.0
    %1071 = vmatpush1.msra.mxu0 0.0
    %1072 = vmatprep.subr.mxu0 0.0
    %1073 = vmatpush1.msra.mxu0 0.0
    %1074 = vmatprep.subr.mxu0 0.0
    %1075 = vmatpush1.msra.mxu0 0.0
    %1076 = vmatprep.subr.mxu0 0.0
    %1077 = vmatpush1.msra.mxu0 0.0
    %1078 = vmatprep.subr.mxu0 0.0
    %1079 = vmatpush1.msra.mxu0 0.0
    %1080 = vmatprep.subr.mxu0 0.0
    %1081 = vmatpush1.msra.mxu0 0.0
    %1082 = vmatprep.mubr.f32.mxu0 0.0
    %1083 = vmatmul.mubr.f32.gmra.mrb[0].mxu0 %v1016
    %v1084 = vpop.f32.mrb[0].mxu0
    %v1085 = vadd.f32 0.0, %v1084
    %v1086 = vpop.f32.mrb[0].mxu0
    %1087 = vdwg.mxu0
    %v1088 = vmul.f32 %v1085, %v1008
    %v1089 = vsel %vm427, %v1088, 0.0
    %1090 = vadd.xlane.f32.xlu0 %v1089
    %v1091 = vpop.xlane.xlu0 %1090
    %v1092 = vld [vmem:[#allocation2] sm:$0x1]
    %v1094 = vlaneseq
    %v1095 = vshrl.u32 %v1094, 7
    %v1096 = vsub.s32 0, %v1095
    %v1097 = vrot.slane %v1092, %v1096
    %v1099 = vadd.f32 %v1091, %v1097
    %vm1100 = vcmask 7168
    %v1101 = vsel %vm1100, %v1099, -inf
    %v1102 = vrot.slane %v1101, 4
    %v1103 = vmax.f32 %v1101, %v1102
    %v1104 = vrot.slane %v1103, 2
    %v1105 = vmax.f32 %v1103, %v1104
    %v1106 = vrot.slane %v1105, 1
    %v1107 = vmax.f32 %v1105, %v1106
    %v1108 = vsub.f32 %v1099, %v1107
    %v1109 = vld [vmem:[%s14] sm:$0xff]
    %v1110 = vmul.f32 %v1108, 1.442695
    %v1111 = vpow.pop %v1110
    %v1113 = vsel %vm937, %v1109, 0
    %1115 = vmatprep.subr.mxu0 0.0
    %1116 = vmatpush1.msra.mxu0 %v1111
    %1117 = vmatprep.subr.mxu0 0.0
    %1118 = vmatpush1.msra.mxu0 0.0
    %1119 = vmatprep.subr.mxu0 0.0
    %1120 = vmatpush1.msra.mxu0 0.0
    %1121 = vmatprep.subr.mxu0 0.0
    %1122 = vmatpush1.msra.mxu0 0.0
    %1123 = vmatprep.subr.mxu0 0.0
    %1124 = vmatpush1.msra.mxu0 0.0
    %1125 = vmatprep.subr.mxu0 0.0
    %1126 = vmatpush1.msra.mxu0 0.0
    %1127 = vmatprep.subr.mxu0 0.0
    %1128 = vmatpush1.msra.mxu0 0.0
    %1129 = vmatprep.subr.mxu0 0.0
    %1130 = vmatpush1.msra.mxu0 0.0
    %1131 = vmatprep.subr.mxu0 0.0
    %1132 = vmatpush1.msra.mxu0 0.0
    %1133 = vmatprep.subr.mxu0 0.0
    %1134 = vmatpush1.msra.mxu0 0.0
    %1135 = vmatprep.subr.mxu0 0.0
    %1136 = vmatpush1.msra.mxu0 0.0
    %1137 = vmatprep.subr.mxu0 0.0
    %1138 = vmatpush1.msra.mxu0 0.0
    %1139 = vmatprep.subr.mxu0 0.0
    %1140 = vmatpush1.msra.mxu0 0.0
    %1141 = vmatprep.subr.mxu0 0.0
    %1142 = vmatpush1.msra.mxu0 0.0
    %1143 = vmatprep.subr.mxu0 0.0
    %1144 = vmatpush1.msra.mxu0 0.0
    %1145 = vmatprep.subr.mxu0 0.0
    %1146 = vmatpush1.msra.mxu0 0.0
    %1147 = vmatprep.subr.mxu0 0.0
    %1148 = vmatpush1.msra.mxu0 0.0
    %1149 = vmatprep.subr.mxu0 0.0
    %1150 = vmatpush1.msra.mxu0 0.0
    %1151 = vmatprep.subr.mxu0 0.0
    %1152 = vmatpush1.msra.mxu0 0.0
    %1153 = vmatprep.subr.mxu0 0.0
    %1154 = vmatpush1.msra.mxu0 0.0
    %1155 = vmatprep.subr.mxu0 0.0
    %1156 = vmatpush1.msra.mxu0 0.0
    %1157 = vmatprep.subr.mxu0 0.0
    %1158 = vmatpush1.msra.mxu0 0.0
    %1159 = vmatprep.subr.mxu0 0.0
    %1160 = vmatpush1.msra.mxu0 0.0
    %1161 = vmatprep.subr.mxu0 0.0
    %1162 = vmatpush1.msra.mxu0 0.0
    %1163 = vmatprep.subr.mxu0 0.0
    %1164 = vmatpush1.msra.mxu0 0.0
    %1165 = vmatprep.subr.mxu0 0.0
    %1166 = vmatpush1.msra.mxu0 0.0
    %1167 = vmatprep.subr.mxu0 0.0
    %1168 = vmatpush1.msra.mxu0 0.0
    %1169 = vmatprep.subr.mxu0 0.0
    %1170 = vmatpush1.msra.mxu0 0.0
    %1171 = vmatprep.subr.mxu0 0.0
    %1172 = vmatpush1.msra.mxu0 0.0
    %1173 = vmatprep.subr.mxu0 0.0
    %1174 = vmatpush1.msra.mxu0 0.0
    %1175 = vmatprep.subr.mxu0 0.0
    %1176 = vmatpush1.msra.mxu0 0.0
    %1177 = vmatprep.subr.mxu0 0.0
    %1178 = vmatpush1.msra.mxu0 0.0
    %1179 = vmatprep.mubr.f32.mxu0 0.0
    %1180 = vmatmul.mubr.f32.gmra.mrb[0].mxu0 %v1113
    %v1181 = vpop.f32.mrb[0].mxu0
    %v1182 = vadd.f32 0.0, %v1181
    %v1183 = vpop.f32.mrb[0].mxu0
    %1184 = vdwg.mxu0
    %v1185 = vlog2.pop %v1182
    %v1186 = vmul.f32 %v1185, 0.6931472
    %v1187 = vsub.f32 %v1108, %v1186
    %1188 = vst.msk [vmem:[%s15] sm:$0xff] %vm1100, %v1187
    // Predicated region
    $region78: #{tpu_custom_call.1} parent=1 // pred_check
      _
    $region79: #{tpu_custom_call.1} parent=1 // pred_check_branch
      %1190 = sbr.rel (0) target = $region81
    $region80: #{tpu_custom_call.1} parent=1 // pred_region
      _
    $region81: #{tpu_custom_call.1} parent=1 // pred_fallthru
      _
    // Predicated region
    $region82: #{tpu_custom_call.1} parent=1 // pred_check
      _
    $region83: #{tpu_custom_call.1} parent=1 // pred_check_branch
      %1192 = sbr.rel (0) target = $region85
    $region84: #{tpu_custom_call.1} parent=1 // pred_region
      _
    $region85: #{tpu_custom_call.1} parent=1 // pred_fallthru
      _
    %1193 = vsyncpa [#allocation4], 1
    %1194 = vsyncpa [#allocation6], 1
    %1195 = vsyncpa [#allocation9], 1

</llo_original>
